<compile_context>
chip_gen: v7x
topology: tpu7x:2x2x1
jax: 0.10.0
libtpu: 0.0.40
codegen_flags: <defaults>
</compile_context>

<pallas_src>
import jax
import jax.numpy as jnp
from jax import lax
from jax.experimental import pallas as pl
from jax.experimental.pallas import tpu as pltpu


def _make_mfm_kernel(Cin, Cout, KH, KW, Wp, Q):
    C2 = 2 * Cout

    def kernel(xp_ref, w_ref, b_ref, o_ref, col_ref):
        # xp_ref : (1, Cin, P)        bf16 — zero-padded image, spatial flat on lanes
        # w_ref  : (C2, KH*KW*Cin)    bf16 — tap-major flattened weights
        # b_ref  : (C2, 1)            f32
        # o_ref  : (1, Cout, Q)       Q = H*Wp (lane-dense; cols x >= W are garbage)
        # col_ref: (KH*KW*Cin, Q)     bf16 scratch — im2col matrix
        for kh in range(KH):
            for kw in range(KW):
                tap = kh * KW + kw
                shift = kh * Wp + kw
                # Shifted view of the flattened padded image = one conv tap.
                col_ref[tap * Cin:(tap + 1) * Cin, :] = xp_ref[0, :, shift:shift + Q]

        # Single MXU matmul, f32 accumulate, bias folded in once.
        acc = jnp.dot(w_ref[...], col_ref[...],
                      preferred_element_type=jnp.float32) + b_ref[...]

        # Max-Feature-Map: elementwise max of the two channel (sublane) halves.
        o_ref[0] = jnp.maximum(acc[:Cout, :], acc[Cout:, :]).astype(o_ref.dtype)

    return kernel


def mfm_conv(x_nchw, w_oihw, bias, *, padding=1, stride=1):
    """mfm (type=1) forward. x_nchw: (N, Cin, H, W); w_oihw: (2*Cout, Cin, KH, KW)."""
    N, Cin, H, W = x_nchw.shape
    C2, Cin_w, KH, KW = w_oihw.shape
    assert Cin_w == Cin and C2 % 2 == 0
    assert stride == 1, "only stride=1 (the LCNN mfm default) is implemented"
    # TODO(synk): implement the type=2 (Linear) mfm path as a plain matmul kernel.
    Cout = C2 // 2
    pad = padding
    Wp = W + 2 * pad
    Q = H * Wp                       # flattened output width (padded columns included)
    extra = 1                        # one extra zero row so every tap slice is in-bounds
    Hp = H + 2 * pad + extra
    P = Hp * Wp
    assert Q + (KH - 1) * Wp + (KW - 1) <= P
    K = KH * KW * Cin

    # bf16 operands for the MXU (accumulation stays f32 inside the kernel).
    x_bf = x_nchw.astype(jnp.bfloat16)
    xp = jnp.pad(x_bf, ((0, 0), (0, 0), (pad, pad + extra), (pad, pad)))
    xp_flat = xp.reshape(N, Cin, P)  # contiguous reshape — free in HBM (row-major)

    # (C2, Cin, KH, KW) -> (C2, KH, KW, Cin) -> (C2, K); tap-major to match col rows.
    w_mat = jnp.transpose(w_oihw, (0, 2, 3, 1)).reshape(C2, K).astype(jnp.bfloat16)
    b_col = bias.reshape(C2, 1).astype(jnp.float32)

    out_flat = pl.pallas_call(
        _make_mfm_kernel(Cin, Cout, KH, KW, Wp, Q),
        out_shape=jax.ShapeDtypeStruct((N, Cout, Q), x_nchw.dtype),
        grid_spec=pltpu.PrefetchScalarGridSpec(
            num_scalar_prefetch=0,
            grid=(N,),  # batch axis; "parallel" lets megacore split it across TCs
            in_specs=[
                pl.BlockSpec((1, Cin, P), lambda n: (n, 0, 0)),
                pl.BlockSpec((C2, K), lambda n: (0, 0)),
                pl.BlockSpec((C2, 1), lambda n: (0, 0)),
            ],
            out_specs=pl.BlockSpec((1, Cout, Q), lambda n: (n, 0, 0)),
            scratch_shapes=[
                pltpu.VMEM((K, Q), jnp.bfloat16),  # im2col matrix
            ],
        ),
        compiler_params=pltpu.CompilerParams(
            dimension_semantics=("parallel",),
        ),
    )(xp_flat, w_mat, b_col)

    # (N, Cout, H*Wp) -> (N, Cout, H, Wp) (contiguous reshape) -> drop the pad columns.
    return out_flat.reshape(N, Cout, H, Wp)[..., :W]
    # TODO(synk): for large H/W (e.g. LCNN on big spectrograms) add a row-tiled grid
    # axis with a one-row halo instead of one whole image per grid step (VMEM bound on
    # v7x's 64 MiB).


def _reference(x_nchw, w_oihw, bias, padding=1):
    # Pure-JAX reference (XLA conv) for correctness check.
    y = lax.conv_general_dilated(
        x_nchw, w_oihw, window_strides=(1, 1),
        padding=((padding, padding), (padding, padding)),
        dimension_numbers=("NCHW", "OIHW", "NCHW"),
        precision=lax.Precision.HIGHEST,
    ) + bias.reshape(1, -1, 1, 1)
    cout = w_oihw.shape[0] // 2
    return jnp.maximum(y[:, :cout], y[:, cout:])


if __name__ == "__main__":
    # Small shapes consistent with mfm(in_channels=4, out_channels=8, k=3, s=1, p=1)
    N, Cin, H, W = 2, 4, 16, 16
    Cout = 8
    C2 = 2 * Cout

    key = jax.random.PRNGKey(0)
    kx, kw, kb = jax.random.split(key, 3)
    x = jax.random.normal(kx, (N, Cin, H, W), dtype=jnp.float32)
    fan_in = Cin * 3 * 3
    bound = 1.0 / (fan_in ** 0.5)
    w = jax.random.uniform(kw, (C2, Cin, 3, 3), jnp.float32, -bound, bound)
    b = jax.random.uniform(kb, (C2,), jnp.float32, -bound, bound)

    out = mfm_conv(x, w, b)
    out = jax.block_until_ready(out)
    assert out.shape == (N, Cout, H, W), out.shape

    # Reference computed on the same bf16-quantized operands (the kernel uses bf16 x/w
    # with f32 accumulation), so the comparison isolates kernel correctness.
    xq = x.astype(jnp.bfloat16).astype(jnp.float32)
    wq = w.astype(jnp.bfloat16).astype(jnp.float32)
    ref = _reference(xq, wq, b)
    err = float(jnp.max(jnp.abs(out - ref)))
    assert jnp.allclose(out, ref, atol=2e-3, rtol=2e-3), err

    print("KERNEL_OK")
</pallas_src>

<mosaic_0001>
module attributes {stable_mosaic.version = 11 : i64} {
  func.func @kernel(%arg0: i32, %arg1: memref<1x4x342xbf16, #tpu.memory_space<vmem>>, %arg2: memref<16x36xbf16, #tpu.memory_space<vmem>>, %arg3: memref<16x1xf32, #tpu.memory_space<vmem>>, %arg4: memref<1x8x288xf32, #tpu.memory_space<vmem>>, %arg5: memref<36x288xbf16, #tpu.memory_space<vmem>>) attributes {dimension_semantics = [#tpu.dimension_semantics<parallel>], iteration_bounds = array<i64: 2>, scalar_prefetch = 0 : i64, scratch_operands = 1 : i64, tpu.core_type = #tpu.core_type<tc>, window_params = [{transform_indices = @transform_0, window_bounds = array<i64: 1, 4, 342>}, {pipeline_mode = #tpu.pipeline_mode<synchronous>, transform_indices = @transform_1, window_bounds = array<i64: 16, 36>}, {pipeline_mode = #tpu.pipeline_mode<synchronous>, transform_indices = @transform_2, window_bounds = array<i64: 16, 1>}, {transform_indices = @transform_3, window_bounds = array<i64: 1, 8, 288>}]} {
    %c0 = arith.constant 0 : index
    %c0_0 = arith.constant 0 : index
    %c0_1 = arith.constant 0 : index
    %0 = vector.load %arg1[%c0, %c0_0, %c0_1] : memref<1x4x342xbf16, #tpu.memory_space<vmem>>, vector<1x4x288xbf16>
    %1 = vector.shape_cast %0 : vector<1x4x288xbf16> to vector<4x288xbf16>
    %c0_2 = arith.constant 0 : index
    %c0_3 = arith.constant 0 : index
    %2 = vector.load %arg5[%c0_2, %c0_3] : memref<36x288xbf16, #tpu.memory_space<vmem>>, vector<4x288xbf16>
    tpu.vector_store %arg5[%c0_2, %c0_3], %1 {strides = array<i32>} : memref<36x288xbf16, #tpu.memory_space<vmem>>, vector<4x288xbf16>,
    %c0_4 = arith.constant 0 : index
    %c0_5 = arith.constant 0 : index
    %c1 = arith.constant 1 : index
    %3 = vector.load %arg1[%c0_4, %c0_5, %c1] : memref<1x4x342xbf16, #tpu.memory_space<vmem>>, vector<1x4x288xbf16>
    %4 = vector.shape_cast %3 : vector<1x4x288xbf16> to vector<4x288xbf16>
    %c4 = arith.constant 4 : index
    %c0_6 = arith.constant 0 : index
    %5 = vector.load %arg5[%c4, %c0_6] : memref<36x288xbf16, #tpu.memory_space<vmem>>, vector<4x288xbf16>
    tpu.vector_store %arg5[%c4, %c0_6], %4 {strides = array<i32>} : memref<36x288xbf16, #tpu.memory_space<vmem>>, vector<4x288xbf16>,
    %c0_7 = arith.constant 0 : index
    %c0_8 = arith.constant 0 : index
    %c2 = arith.constant 2 : index
    %6 = vector.load %arg1[%c0_7, %c0_8, %c2] : memref<1x4x342xbf16, #tpu.memory_space<vmem>>, vector<1x4x288xbf16>
    %7 = vector.shape_cast %6 : vector<1x4x288xbf16> to vector<4x288xbf16>
    %c8 = arith.constant 8 : index
    %c0_9 = arith.constant 0 : index
    %8 = vector.load %arg5[%c8, %c0_9] : memref<36x288xbf16, #tpu.memory_space<vmem>>, vector<4x288xbf16>
    tpu.vector_store %arg5[%c8, %c0_9], %7 {strides = array<i32>} : memref<36x288xbf16, #tpu.memory_space<vmem>>, vector<4x288xbf16>,
    %c0_10 = arith.constant 0 : index
    %c0_11 = arith.constant 0 : index
    %c18 = arith.constant 18 : index
    %9 = vector.load %arg1[%c0_10, %c0_11, %c18] : memref<1x4x342xbf16, #tpu.memory_space<vmem>>, vector<1x4x288xbf16>
    %10 = vector.shape_cast %9 : vector<1x4x288xbf16> to vector<4x288xbf16>
    %c12 = arith.constant 12 : index
    %c0_12 = arith.constant 0 : index
    %11 = vector.load %arg5[%c12, %c0_12] : memref<36x288xbf16, #tpu.memory_space<vmem>>, vector<4x288xbf16>
    tpu.vector_store %arg5[%c12, %c0_12], %10 {strides = array<i32>} : memref<36x288xbf16, #tpu.memory_space<vmem>>, vector<4x288xbf16>,
    %c0_13 = arith.constant 0 : index
    %c0_14 = arith.constant 0 : index
    %c19 = arith.constant 19 : index
    %12 = vector.load %arg1[%c0_13, %c0_14, %c19] : memref<1x4x342xbf16, #tpu.memory_space<vmem>>, vector<1x4x288xbf16>
    %13 = vector.shape_cast %12 : vector<1x4x288xbf16> to vector<4x288xbf16>
    %c16 = arith.constant 16 : index
    %c0_15 = arith.constant 0 : index
    %14 = vector.load %arg5[%c16, %c0_15] : memref<36x288xbf16, #tpu.memory_space<vmem>>, vector<4x288xbf16>
    tpu.vector_store %arg5[%c16, %c0_15], %13 {strides = array<i32>} : memref<36x288xbf16, #tpu.memory_space<vmem>>, vector<4x288xbf16>,
    %c0_16 = arith.constant 0 : index
    %c0_17 = arith.constant 0 : index
    %c20 = arith.constant 20 : index
    %15 = vector.load %arg1[%c0_16, %c0_17, %c20] : memref<1x4x342xbf16, #tpu.memory_space<vmem>>, vector<1x4x288xbf16>
    %16 = vector.shape_cast %15 : vector<1x4x288xbf16> to vector<4x288xbf16>
    %c20_18 = arith.constant 20 : index
    %c0_19 = arith.constant 0 : index
    %17 = vector.load %arg5[%c20_18, %c0_19] : memref<36x288xbf16, #tpu.memory_space<vmem>>, vector<4x288xbf16>
    tpu.vector_store %arg5[%c20_18, %c0_19], %16 {strides = array<i32>} : memref<36x288xbf16, #tpu.memory_space<vmem>>, vector<4x288xbf16>,
    %c0_20 = arith.constant 0 : index
    %c0_21 = arith.constant 0 : index
    %c36 = arith.constant 36 : index
    %18 = vector.load %arg1[%c0_20, %c0_21, %c36] : memref<1x4x342xbf16, #tpu.memory_space<vmem>>, vector<1x4x288xbf16>
    %19 = vector.shape_cast %18 : vector<1x4x288xbf16> to vector<4x288xbf16>
    %c24 = arith.constant 24 : index
    %c0_22 = arith.constant 0 : index
    %20 = vector.load %arg5[%c24, %c0_22] : memref<36x288xbf16, #tpu.memory_space<vmem>>, vector<4x288xbf16>
    tpu.vector_store %arg5[%c24, %c0_22], %19 {strides = array<i32>} : memref<36x288xbf16, #tpu.memory_space<vmem>>, vector<4x288xbf16>,
    %c0_23 = arith.constant 0 : index
    %c0_24 = arith.constant 0 : index
    %c37 = arith.constant 37 : index
    %21 = vector.load %arg1[%c0_23, %c0_24, %c37] : memref<1x4x342xbf16, #tpu.memory_space<vmem>>, vector<1x4x288xbf16>
    %22 = vector.shape_cast %21 : vector<1x4x288xbf16> to vector<4x288xbf16>
    %c28 = arith.constant 28 : index
    %c0_25 = arith.constant 0 : index
    %23 = vector.load %arg5[%c28, %c0_25] : memref<36x288xbf16, #tpu.memory_space<vmem>>, vector<4x288xbf16>
    tpu.vector_store %arg5[%c28, %c0_25], %22 {strides = array<i32>} : memref<36x288xbf16, #tpu.memory_space<vmem>>, vector<4x288xbf16>,
    %c0_26 = arith.constant 0 : index
    %c0_27 = arith.constant 0 : index
    %c38 = arith.constant 38 : index
    %24 = vector.load %arg1[%c0_26, %c0_27, %c38] : memref<1x4x342xbf16, #tpu.memory_space<vmem>>, vector<1x4x288xbf16>
    %25 = vector.shape_cast %24 : vector<1x4x288xbf16> to vector<4x288xbf16>
    %c32 = arith.constant 32 : index
    %c0_28 = arith.constant 0 : index
    %26 = vector.load %arg5[%c32, %c0_28] : memref<36x288xbf16, #tpu.memory_space<vmem>>, vector<4x288xbf16>
    tpu.vector_store %arg5[%c32, %c0_28], %25 {strides = array<i32>} : memref<36x288xbf16, #tpu.memory_space<vmem>>, vector<4x288xbf16>,
    %c0_29 = arith.constant 0 : index
    %c0_30 = arith.constant 0 : index
    %27 = vector.load %arg2[%c0_29, %c0_30] : memref<16x36xbf16, #tpu.memory_space<vmem>>, vector<16x36xbf16>
    %c0_31 = arith.constant 0 : index
    %c0_32 = arith.constant 0 : index
    %28 = vector.load %arg5[%c0_31, %c0_32] : memref<36x288xbf16, #tpu.memory_space<vmem>>, vector<36x288xbf16>
    %cst = arith.constant dense<0.000000e+00> : vector<16x288xf32>
    %29 = tpu.matmul %27, %28, %cst {dimension_numbers = #tpu.dot_dimension_numbers<[1], [0], [0], [1], [0, 0, 1, 1], [], []>} : vector<16x36xbf16>, vector<36x288xbf16>, vector<16x288xf32> -> vector<16x288xf32>
    %c0_33 = arith.constant 0 : index
    %c0_34 = arith.constant 0 : index
    %30 = vector.load %arg3[%c0_33, %c0_34] : memref<16x1xf32, #tpu.memory_space<vmem>>, vector<16x1xf32>
    %31 = vector.broadcast %30 : vector<16x1xf32> to vector<16x288xf32>
    %32 = arith.addf %29, %31 : vector<16x288xf32>
    %33 = vector.extract_strided_slice %32 {offsets = [0, 0], sizes = [8, 288], strides = [1, 1]} : vector<16x288xf32> to vector<8x288xf32>
    %34 = vector.extract_strided_slice %32 {offsets = [8, 0], sizes = [8, 288], strides = [1, 1]} : vector<16x288xf32> to vector<8x288xf32>
    %35 = arith.maximumf %33, %34 : vector<8x288xf32>
    %c0_35 = arith.constant 0 : index
    %c0_36 = arith.constant 0 : index
    %c0_37 = arith.constant 0 : index
    %36 = vector.load %arg4[%c0_35, %c0_36, %c0_37] : memref<1x8x288xf32, #tpu.memory_space<vmem>>, vector<1x8x288xf32>
    %37 = vector.shape_cast %36 : vector<1x8x288xf32> to vector<8x288xf32>
    %38 = vector.shape_cast %35 : vector<8x288xf32> to vector<1x8x288xf32>
    tpu.vector_store %arg4[%c0_35, %c0_36, %c0_37], %38 {strides = array<i32>} : memref<1x8x288xf32, #tpu.memory_space<vmem>>, vector<1x8x288xf32>,
    return
  }
  func.func @transform_0(%arg0: i32) -> (i32, i32, i32) {
    %c0_i32 = arith.constant 0 : i32
    %c0_i32_0 = arith.constant 0 : i32
    %c0_i32_1 = arith.constant 0 : i32
    return %arg0, %c0_i32, %c0_i32_0 : i32, i32, i32
  }
  func.func @transform_1(%arg0: i32) -> (i32, i32) {
    %c0_i32 = arith.constant 0 : i32
    %c0_i32_0 = arith.constant 0 : i32
    %c0_i32_1 = arith.constant 0 : i32
    return %c0_i32, %c0_i32_0 : i32, i32
  }
  func.func @transform_2(%arg0: i32) -> (i32, i32) {
    %c0_i32 = arith.constant 0 : i32
    %c0_i32_0 = arith.constant 0 : i32
    %c0_i32_1 = arith.constant 0 : i32
    return %c0_i32, %c0_i32_0 : i32, i32
  }
  func.func @transform_3(%arg0: i32) -> (i32, i32, i32) {
    %c0_i32 = arith.constant 0 : i32
    %c0_i32_0 = arith.constant 0 : i32
    %c0_i32_1 = arith.constant 0 : i32
    return %arg0, %c0_i32, %c0_i32_0 : i32, i32, i32
  }
}

</mosaic_0001>

<llo_original>
// kernel: tpu_custom_call.1
$region0: #{tpu_custom_call.1}
  #allocation0 [shape = 'u32[]', space=smem, size = 0x4, offset = 0x4, fixed_abs, tag = 'smem constant byte address 0x4 - core index']
  #allocation1 [shape = 'u32[144,128]{1,0:T(1,128)}', space=vmem, size = 0x12000, scoped, tag = 'internal scratch']
  #allocation2 [shape = 'bf16[36,288]{1,0:T(8,128)(2,1)}', space=vmem, size = 0x7800, scoped, tag = 'scratch operand']
  %s0 = inlined_call_operand.vmem [shape: bf16[2,4,342], index: 0, kind: input, shape index: {}]
  %s1 = inlined_call_operand.vmem [shape: bf16[16,36], index: 1, kind: input, shape index: {}]
  %s2 = inlined_call_operand.vmem [shape: f32[16,1], index: 2, kind: input, shape index: {}]
  %s3 = inlined_call_operand.hbm [shape: f32[2,8,288], index: 3, kind: output, shape index: {}]
  %s4 = sld [smem:[#allocation0]]
  $region45: #{tpu_custom_call.1} parent=0
    _
  %s6 = ssub.s32 1, %s4
  %s7 = scalar_select 0, %s6, %s4
  $region1: #{tpu_custom_call.1} parent=0
    #allocation3 [shape = 'u8[24576]{0}', space=vmem, size = 0x6000, scoped, tag = 'output window, operand 0']
    #allocation4 [shape = 's32[2]{0}', space=sflag, size = 0x8, scoped, tag = 'scoped memory for tpu_custom_call.1']
    %8 = vsyncpa [#allocation4], 0
    %s9 = scalar_lea.sflag [#allocation4], 1
    %10 = vsyncpa %s9, 0
    loop: start=0, step=1, limit=4
    $region2: #{tpu_custom_call.1} parent=1 // loop_pre_header
      _
    $region3: #{tpu_custom_call.1} parent=1 // loop_header
      %s12 = sphi 0, %s16
      %p13 = scmp.ge.s32.totalorder %s12, 4
      %s22 = sphi 0, %s24
      %s25 = sphi 0, %s22
      %s26 = sphi 0, %s25
      %s42 = sphi 0, %s26
      %s46 = sphi 0, %s46
      %s48 = sphi 0, %s46
      %s49 = sphi 0, %s48
      %s63 = sphi 0, %s49
      %s67 = sphi 0, %s67
      %s69 = sphi 0, %s67
      %s70 = sphi 0, %s69
      %s84 = sphi 0, %s70
      %s90 = sphi 0, %s92
      %s93 = sphi 0, %s90
      %s94 = sphi 0, %s93
      %s110 = sphi 0, %s94
    $region4: #{tpu_custom_call.1} parent=1 // loop_header_branch
      %15 = sbr.rel (%p13) target = $region8
    $region5: #{tpu_custom_call.1} parent=1 // loop_body
      %s17 = ssub.s32 %s12, 1
      %s18 = ssub.s32 %s12, 2
      %s19 = sadd.s32 %s12, 1
      %s20 = ssub.s32 %s12, %s19
      %p21 = scmp.eq.s32.totalorder %s20, 0
      %s23 = sadd.s32 %s22, 1
      %s24 = scalar_select %p21, %s22, %s23
      %p27 = pneg %p21
      %p28 = scmp.eq.s32.totalorder %s12, 1
      %p29 = por %p27, %p28
      %p30 = scmp.ne.s32.totalorder %s22, %s25
      %p31 = scmp.eq.s32.totalorder %s12, 0
      %p32 = por %p30, %p31
      %p33 = scmp.ne.s32.totalorder %s22, %s25
      %p34 = scmp.eq.s32.totalorder %s17, 1
      %p35 = por %p33, %p34
      %p36 = scmp.ne.s32.totalorder %s25, %s26
      %p37 = scmp.eq.s32.totalorder %s17, 0
      %p38 = por %p36, %p37
      %p39 = scmp.ne.s32.totalorder %s25, %s26
      %p40 = scmp.eq.s32.totalorder %s18, 1
      %p41 = por %p39, %p40
      %p43 = scmp.ne.s32.totalorder %s26, %s42
      %p44 = scmp.eq.s32.totalorder %s18, 0
      %p45 = por %p43, %p44
      %s47 = sadd.s32 %s46, 1
      %p50 = scmp.eq.s32.totalorder %s12, 1
      %p51 = scmp.ne.s32.totalorder %s46, %s48
      %p52 = scmp.eq.s32.totalorder %s12, 0
      %p53 = por %p51, %p52
      %p54 = scmp.ne.s32.totalorder %s46, %s48
      %p55 = scmp.eq.s32.totalorder %s17, 1
      %p56 = por %p54, %p55
      %p57 = scmp.ne.s32.totalorder %s48, %s49
      %p58 = scmp.eq.s32.totalorder %s17, 0
      %p59 = por %p57, %p58
      %p60 = scmp.ne.s32.totalorder %s48, %s49
      %p61 = scmp.eq.s32.totalorder %s18, 1
      %p62 = por %p60, %p61
      %p64 = scmp.ne.s32.totalorder %s49, %s63
      %p65 = scmp.eq.s32.totalorder %s18, 0
      %p66 = por %p64, %p65
      %s68 = sadd.s32 %s67, 1
      %p71 = scmp.eq.s32.totalorder %s12, 1
      %p72 = scmp.ne.s32.totalorder %s67, %s69
      %p73 = scmp.eq.s32.totalorder %s12, 0
      %p74 = por %p72, %p73
      %p75 = scmp.ne.s32.totalorder %s67, %s69
      %p76 = scmp.eq.s32.totalorder %s17, 1
      %p77 = por %p75, %p76
      %p78 = scmp.ne.s32.totalorder %s69, %s70
      %p79 = scmp.eq.s32.totalorder %s17, 0
      %p80 = por %p78, %p79
      %p81 = scmp.ne.s32.totalorder %s69, %s70
      %p82 = scmp.eq.s32.totalorder %s18, 1
      %p83 = por %p81, %p82
      %p85 = scmp.ne.s32.totalorder %s70, %s84
      %p86 = scmp.eq.s32.totalorder %s18, 0
      %p87 = por %p85, %p86
      %s88 = ssub.s32 %s12, %s19
      %p89 = scmp.eq.s32.totalorder %s88, 0
      %s91 = sadd.s32 %s90, 1
      %s92 = scalar_select %p89, %s90, %s91
      %p95 = pneg %p89
      %p96 = scmp.eq.s32.totalorder %s12, 1
      %p97 = por %p95, %p96
      %p98 = scmp.ne.s32.totalorder %s90, %s93
      %p99 = scmp.eq.s32.totalorder %s12, 0
      %p100 = por %p98, %p99
      %p101 = scmp.ne.s32.totalorder %s90, %s93
      %p102 = scmp.eq.s32.totalorder %s17, 1
      %p103 = por %p101, %p102
      %p104 = scmp.ne.s32.totalorder %s93, %s94
      %p105 = scmp.eq.s32.totalorder %s17, 0
      %p106 = por %p104, %p105
      %p107 = scmp.ne.s32.totalorder %s93, %s94
      %p108 = scmp.eq.s32.totalorder %s18, 1
      %p109 = por %p107, %p108
      %p111 = scmp.ne.s32.totalorder %s94, %s110
      %p112 = scmp.eq.s32.totalorder %s18, 0
      %p113 = por %p111, %p112
      %p114 = scmp.le.s32.totalorder 1, %s12
      %p115 = scmp.lt.s32.totalorder %s12, 3
      %p116 = pnand %p114, %p115
      %p117 = pneg %p116
      // Predicated region
      $region9: #{tpu_custom_call.1} parent=5 // pred_check
        _
      $region10: #{tpu_custom_call.1} parent=5 // pred_check_branch
        %119 = sbr.rel (%p116) target = $region12
      $region11: #{tpu_custom_call.1} parent=5 // pred_region
        %s120 = ssub.s32 %s12, 1
        // Predicated region
        $region13: #{tpu_custom_call.1} parent=11 // pred_check
          %p121 = pneg %p59
        $region14: #{tpu_custom_call.1} parent=11 // pred_check_branch
          %123 = sbr.rel (%p121) target = $region16
        $region15: #{tpu_custom_call.1} parent=11 // pred_region
          _
        $region16: #{tpu_custom_call.1} parent=11 // pred_fallthru
          _
        // Predicated region
        $region17: #{tpu_custom_call.1} parent=11 // pred_check
          %p124 = pneg %p80
        $region18: #{tpu_custom_call.1} parent=11 // pred_check_branch
          %126 = sbr.rel (%p124) target = $region20
        $region19: #{tpu_custom_call.1} parent=11 // pred_region
          _
        $region20: #{tpu_custom_call.1} parent=11 // pred_fallthru
          _
      $region12: #{tpu_custom_call.1} parent=5 // pred_fallthru
        _
      %p127 = scmp.lt.s32.totalorder %s12, 2
      // Predicated region
      $region21: #{tpu_custom_call.1} parent=5 // pred_check
        %p128 = pneg %p127
      $region22: #{tpu_custom_call.1} parent=5 // pred_check_branch
        %130 = sbr.rel (%p128) target = $region24
      $region23: #{tpu_custom_call.1} parent=5 // pred_region
        // Predicated region
        $region25: #{tpu_custom_call.1} parent=23 // pred_check
          %p131 = pneg %p32
        $region26: #{tpu_custom_call.1} parent=23 // pred_check_branch
          %133 = sbr.rel (%p131) target = $region28
        $region27: #{tpu_custom_call.1} parent=23 // pred_region
          %p134 = scmp.lt.s32.totalorder %s12, 1
          %s135 = scalar_select %p134, %s12, 1
          %s136 = smul.addr %s135, 3
          %s137 = smul.addr %s136, 2
          %s138 = scalar_lea.vmem %s0, %s137
        $region28: #{tpu_custom_call.1} parent=23 // pred_fallthru
          _
      $region24: #{tpu_custom_call.1} parent=5 // pred_fallthru
        _
      %p139 = scmp.le.s32.totalorder 1, %s12
      %p140 = scmp.lt.s32.totalorder %s12, 3
      %p141 = pnand %p139, %p140
      %p142 = pneg %p141
      // Predicated region
      $region29: #{tpu_custom_call.1} parent=5 // pred_check
        _
      $region30: #{tpu_custom_call.1} parent=5 // pred_check_branch
        %144 = sbr.rel (%p141) target = $region32
      $region31: #{tpu_custom_call.1} parent=5 // pred_region
        %s145 = ssub.s32 %s12, 1
        %p146 = scmp.lt.s32.totalorder %s17, 1
        %s147 = scalar_select %p146, %s17, 1
        %s148 = smul.addr %s147, 3
        %s149 = smul.addr %s148, 2
        %s150 = scalar_lea.vmem %s0, %s149
        %p151 = pneg %p38
        %p152 = pneg %p35
        %p153 = pneg %p59
        %p154 = pneg %p56
        %p155 = pneg %p80
        %p156 = pneg %p77
        %p157 = pneg %p106
        %p158 = pneg %p103
        %s159 = sand.u32 %s93, 1
        %s160 = scalar_lea.sflag [#allocation4], %s159
        %s161 = sand.u32 %s93, 1
        %s162 = smul.addr %s161, 24
        %s163 = scalar_lea.vmem [#allocation3], %s162
        %p164 = scmp.lt.s32.totalorder %s17, 1
        %s165 = scalar_select %p164, %s17, 1
        %s166 = smul.addr %s165, 3
        %s167 = smul.addr %s166, 2
        %s168 = scalar_lea.vmem %s0, %s167
        %v170 = vld [vmem:[%s168] sm:$0x3f]
        %v172 = vcombine.high %v170, %v170
        %v174 = vunpack.c.l.s4 1983009808
        %v175 = vunpack.c.0.s8 %v174
        %v176 = vlaneseq
        %v177 = vshrl.u32 %v176, 7
        %v178 = vsub.s32 %v175, %v177
        %v179 = vrot.slane %v170, %v178
        %v181 = vunpack.c.l.s4 1983009808
        %v182 = vunpack.c.0.s8 %v181
        %v183 = vlaneseq
        %v184 = vshrl.u32 %v183, 7
        %v185 = vsub.s32 %v182, %v184
        %v186 = vrot.slane %v172, %v185
        %189 = vst [vmem:[#allocation2] sm:$0x33] %v179
        %vm190 = vcmask 254976
        %191 = vst.msk [vmem:[#allocation2 + $0x8] sm:$0x3] %vm190, %v186
        %v192 = vld [vmem:[%s168] sm:$0x3f]
        %v194 = vcombine.low %v192, %v192
        %v196 = vunpack.c.l.s4 1983009808
        %v197 = vunpack.c.0.s8 %v196
        %v198 = vlaneseq
        %v199 = vshrl.u32 %v198, 7
        %v200 = vsub.s32 %v197, %v199
        %v201 = vrot.slane %v194, %v200
        %v203 = vunpack.c.l.s4 1983009808
        %v204 = vunpack.c.0.s8 %v203
        %v205 = vlaneseq
        %v206 = vshrl.u32 %v205, 7
        %v207 = vsub.s32 %v204, %v206
        %v208 = vrot.slane %v192, %v207
        %209 = vrot.lane.b32.xlu0 %v201, 127
        %v210 = vpop.permute.xlu0 %209
        %211 = vrot.lane.b32.xlu0 %v208, 127
        %v212 = vpop.permute.xlu0 %211
        %v213 = vrot.slane %v210, 4
        %v214 = vrot.slane %v212, 4
        %vm215 = vcmask 1043456
        %v216 = vsel %vm215, %v213, %v214
        %vm217 = vcmask 1039360
        %v218 = vsel %vm217, %v210, %v216
        %221 = vst [vmem:[#allocation2] sm:$0xcc] %v218
        %vm222 = vcmask 257026
        %223 = vst.msk [vmem:[#allocation2 + $0x8] sm:$0xc] %vm222, %v212
        %v224 = vld [vmem:[%s168] sm:$0x3f]
        %v226 = vcombine.high %v224, %v224
        %v228 = vunpack.c.l.s4 1983009808
        %v229 = vunpack.c.0.s8 %v228
        %v230 = vlaneseq
        %v231 = vshrl.u32 %v230, 7
        %v232 = vsub.s32 %v229, %v231
        %v233 = vrot.slane %v224, %v232
        %v235 = vunpack.c.l.s4 1983009808
        %v236 = vunpack.c.0.s8 %v235
        %v237 = vlaneseq
        %v238 = vshrl.u32 %v237, 7
        %v239 = vsub.s32 %v236, %v238
        %v240 = vrot.slane %v226, %v239
        %241 = vrot.lane.b32.xlu0 %v233, 126
        %v242 = vpop.permute.xlu0 %241
        %243 = vrot.lane.b32.xlu0 %v240, 126
        %v244 = vpop.permute.xlu0 %243
        %v245 = vrot.slane %v242, 4
        %v246 = vrot.slane %v244, 4
        %v247 = vsel %vm215, %v245, %v246
        %vm248 = vcmask 1031168
        %v249 = vsel %vm248, %v242, %v247
        %252 = vst [vmem:[#allocation2 + $0xc] sm:$0x33] %v249
        %253 = vst.msk [vmem:[#allocation2 + $0x14] sm:$0x3] %vm190, %v244
        %v254 = vld [vmem:[%s168] sm:$0x3f]
        %v256 = vcombine.low %v254, %v254
        %v258 = vunpack.c.l.s4 1983009808
        %v259 = vunpack.c.0.s8 %v258
        %v260 = vlaneseq
        %v261 = vshrl.u32 %v260, 7
        %v262 = vsub.s32 %v259, %v261
        %v263 = vrot.slane %v256, %v262
        %v265 = vunpack.c.l.s4 1983009808
        %v266 = vunpack.c.0.s8 %v265
        %v267 = vlaneseq
        %v268 = vshrl.u32 %v267, 7
        %v269 = vsub.s32 %v266, %v268
        %v270 = vrot.slane %v254, %v269
        %271 = vrot.lane.b32.xlu0 %v263, 110
        %v272 = vpop.permute.xlu0 %271
        %273 = vrot.lane.b32.xlu0 %v270, 110
        %v274 = vpop.permute.xlu0 %273
        %v275 = vrot.slane %v272, 4
        %v276 = vrot.slane %v274, 4
        %v277 = vsel %vm215, %v275, %v276
        %vm278 = vcmask 900096
        %v279 = vsel %vm278, %v272, %v277
        %282 = vst [vmem:[#allocation2 + $0xc] sm:$0xcc] %v279
        %283 = vst.msk [vmem:[#allocation2 + $0x14] sm:$0xc] %vm222, %v274
        %v284 = vld [vmem:[%s168] sm:$0x3f]
        %v286 = vcombine.high %v284, %v284
        %v288 = vunpack.c.l.s4 1983009808
        %v289 = vunpack.c.0.s8 %v288
        %v290 = vlaneseq
        %v291 = vshrl.u32 %v290, 7
        %v292 = vsub.s32 %v289, %v291
        %v293 = vrot.slane %v284, %v292
        %v295 = vunpack.c.l.s4 1983009808
        %v296 = vunpack.c.0.s8 %v295
        %v297 = vlaneseq
        %v298 = vshrl.u32 %v297, 7
        %v299 = vsub.s32 %v296, %v298
        %v300 = vrot.slane %v286, %v299
        %301 = vrot.lane.b32.xlu0 %v293, 109
        %v302 = vpop.permute.xlu0 %301
        %303 = vrot.lane.b32.xlu0 %v300, 109
        %v304 = vpop.permute.xlu0 %303
        %v305 = vrot.slane %v302, 4
        %v306 = vrot.slane %v304, 4
        %v307 = vsel %vm215, %v305, %v306
        %vm308 = vcmask 891904
        %v309 = vsel %vm308, %v302, %v307
        %312 = vst [vmem:[#allocation2 + $0x18] sm:$0x33] %v309
        %313 = vst.msk [vmem:[#allocation2 + $0x20] sm:$0x3] %vm190, %v304
        %v314 = vld [vmem:[%s168] sm:$0x3f]
        %v316 = vcombine.low %v314, %v314
        %v318 = vunpack.c.l.s4 1983009808
        %v319 = vunpack.c.0.s8 %v318
        %v320 = vlaneseq
        %v321 = vshrl.u32 %v320, 7
        %v322 = vsub.s32 %v319, %v321
        %v323 = vrot.slane %v316, %v322
        %v325 = vunpack.c.l.s4 1983009808
        %v326 = vunpack.c.0.s8 %v325
        %v327 = vlaneseq
        %v328 = vshrl.u32 %v327, 7
        %v329 = vsub.s32 %v326, %v328
        %v330 = vrot.slane %v314, %v329
        %331 = vrot.lane.b32.xlu0 %v323, 108
        %v332 = vpop.permute.xlu0 %331
        %333 = vrot.lane.b32.xlu0 %v330, 108
        %v334 = vpop.permute.xlu0 %333
        %v335 = vrot.slane %v332, 4
        %v336 = vrot.slane %v334, 4
        %v337 = vsel %vm215, %v335, %v336
        %vm338 = vcmask 883712
        %v339 = vsel %vm338, %v332, %v337
        %342 = vst [vmem:[#allocation2 + $0x18] sm:$0xcc] %v339
        %343 = vst.msk [vmem:[#allocation2 + $0x20] sm:$0xc] %vm222, %v334
        %v344 = vld [vmem:[%s168] sm:$0x3f]
        %v346 = vcombine.high %v344, %v344
        %v348 = vunpack.c.l.s4 1983009808
        %v349 = vunpack.c.0.s8 %v348
        %v350 = vlaneseq
        %v351 = vshrl.u32 %v350, 7
        %v352 = vsub.s32 %v349, %v351
        %v353 = vrot.slane %v344, %v352
        %v355 = vunpack.c.l.s4 1983009808
        %v356 = vunpack.c.0.s8 %v355
        %v357 = vlaneseq
        %v358 = vshrl.u32 %v357, 7
        %v359 = vsub.s32 %v356, %v358
        %v360 = vrot.slane %v346, %v359
        %361 = vrot.lane.b32.xlu0 %v353, 92
        %v362 = vpop.permute.xlu0 %361
        %363 = vrot.lane.b32.xlu0 %v360, 92
        %v364 = vpop.permute.xlu0 %363
        %v365 = vrot.slane %v362, 4
        %v366 = vrot.slane %v364, 4
        %v367 = vsel %vm215, %v365, %v366
        %vm368 = vcmask 752640
        %v369 = vsel %vm368, %v362, %v367
        %372 = vst [vmem:[#allocation2 + $0x24] sm:$0x33] %v369
        %373 = vst.msk [vmem:[#allocation2 + $0x2c] sm:$0x3] %vm190, %v364
        %v374 = vld [vmem:[%s168] sm:$0x3f]
        %v376 = vcombine.low %v374, %v374
        %v378 = vunpack.c.l.s4 1983009808
        %v379 = vunpack.c.0.s8 %v378
        %v380 = vlaneseq
        %v381 = vshrl.u32 %v380, 7
        %v382 = vsub.s32 %v379, %v381
        %v383 = vrot.slane %v376, %v382
        %v385 = vunpack.c.l.s4 1983009808
        %v386 = vunpack.c.0.s8 %v385
        %v387 = vlaneseq
        %v388 = vshrl.u32 %v387, 7
        %v389 = vsub.s32 %v386, %v388
        %v390 = vrot.slane %v374, %v389
        %391 = vrot.lane.b32.xlu0 %v383, 91
        %v392 = vpop.permute.xlu0 %391
        %393 = vrot.lane.b32.xlu0 %v390, 91
        %v394 = vpop.permute.xlu0 %393
        %v395 = vrot.slane %v392, 4
        %v396 = vrot.slane %v394, 4
        %v397 = vsel %vm215, %v395, %v396
        %vm398 = vcmask 744448
        %v399 = vsel %vm398, %v392, %v397
        %402 = vst [vmem:[#allocation2 + $0x24] sm:$0xcc] %v399
        %403 = vst.msk [vmem:[#allocation2 + $0x2c] sm:$0xc] %vm222, %v394
        %v404 = vld [vmem:[%s168] sm:$0x3f]
        %v406 = vcombine.high %v404, %v404
        %v408 = vunpack.c.l.s4 1983009808
        %v409 = vunpack.c.0.s8 %v408
        %v410 = vlaneseq
        %v411 = vshrl.u32 %v410, 7
        %v412 = vsub.s32 %v409, %v411
        %v413 = vrot.slane %v404, %v412
        %v415 = vunpack.c.l.s4 1983009808
        %v416 = vunpack.c.0.s8 %v415
        %v417 = vlaneseq
        %v418 = vshrl.u32 %v417, 7
        %v419 = vsub.s32 %v416, %v418
        %v420 = vrot.slane %v406, %v419
        %421 = vrot.lane.b32.xlu0 %v413, 90
        %v422 = vpop.permute.xlu0 %421
        %423 = vrot.lane.b32.xlu0 %v420, 90
        %v424 = vpop.permute.xlu0 %423
        %v425 = vrot.slane %v422, 4
        %v426 = vrot.slane %v424, 4
        %v427 = vsel %vm215, %v425, %v426
        %vm428 = vcmask 736256
        %v429 = vsel %vm428, %v422, %v427
        %432 = vst [vmem:[#allocation2 + $0x30] sm:$0x33] %v429
        %433 = vst.msk [vmem:[#allocation2 + $0x38] sm:$0x3] %vm190, %v424
        %v434 = vld [vmem:[%s1] sm:$0xf]
        %v435 = vld [vmem:[%s1 + $0x4] sm:$0xf]
        %v436 = vld [vmem:[#allocation2] sm:$0xff]
        %v437 = vld [vmem:[#allocation2 + $0x8] sm:$0xf]
        %v438 = vld [vmem:[#allocation2 + $0xc] sm:$0xff]
        %v439 = vld [vmem:[#allocation2 + $0x14] sm:$0xf]
        %v440 = vld [vmem:[#allocation2 + $0x18] sm:$0xff]
        %v441 = vld [vmem:[#allocation2 + $0x20] sm:$0xf]
        %v442 = vld [vmem:[#allocation2 + $0x24] sm:$0xff]
        %v443 = vld [vmem:[#allocation2 + $0x2c] sm:$0xf]
        %v444 = vld [vmem:[#allocation2 + $0x30] sm:$0x33]
        %v445 = vld [vmem:[#allocation2 + $0x38] sm:$0x3]
        %v446 = vld [vmem:[%s2] sm:$0xff]
        %v447 = vld [vmem:[%s2 + $0x8] sm:$0xff]
        %449 = vset.pattern.permute.xlu0 0
        %450 = vperm.xlu0 %449, %v446
        %v451 = vpop.permute.xlu0 %450
        %454 = vset.pattern.permute.xlu0 0
        %455 = vperm.xlu0 %454, %v447
        %v456 = vpop.permute.xlu0 %455
        %v460 = vunpack.c.l.b16 %v434
        %v461 = vunpack.c.l.b16 %v435
        %v462 = vpack.c.b16 %v461, %v460
        %v473 = vunpack.c.l.b16 %v436
        %v474 = vunpack.c.h.b16 %v436
        %v475 = vunpack.c.l.b16 %v437
        %v476 = vunpack.c.l.b16 %v438
        %v477 = vunpack.c.h.b16 %v438
        %v478 = vunpack.c.l.b16 %v439
        %v479 = vunpack.c.l.b16 %v440
        %v480 = vunpack.c.h.b16 %v440
        %v481 = vunpack.c.l.b16 %v441
        %v482 = vunpack.c.l.b16 %v442
        %v483 = vunpack.c.h.b16 %v442
        %v484 = vunpack.c.l.b16 %v443
        %v485 = vunpack.c.l.b16 %v444
        %v486 = vunpack.c.h.b16 %v444
        %v487 = vunpack.c.l.b16 %v445
        %v488 = vpack.c.b16 %v476, %v473
        %v489 = vpack.c.b16 %v477, %v474
        %v490 = vpack.c.b16 %v478, %v475
        %v491 = vpack.c.b16 %v482, %v479
        %v492 = vpack.c.b16 %v483, %v480
        %v493 = vpack.c.b16 %v484, %v481
        %v494 = vpack.c.b16 %v485, %v485
        %v495 = vpack.c.b16 %v486, %v486
        %v496 = vpack.c.b16 %v487, %v487
        %vm503 = vcmask 293888
        %v505 = vsel %vm503, %v462, 0
        %vm507 = vcmask 1041408
        %v509 = vsel %vm507, %v494, 0
        %v512 = vsel %vm507, %v495, 0
        %v515 = vsel %vm507, %v496, 0
        %517 = vmatprep.subr.bf16.mxu0 %v489
        %518 = vmatpush1.bf16.msra.mxu0 %v488
        %519 = vmatprep.subr.bf16.mxu0 %v492
        %520 = vmatpush1.bf16.msra.mxu0 %v491
        %521 = vmatprep.subr.bf16.mxu0 %v512
        %522 = vmatpush1.bf16.msra.mxu0 %v509
        %523 = vmatprep.subr.bf16.mxu0 0
        %524 = vmatpush1.bf16.msra.mxu0 0
        %525 = vmatprep.subr.bf16.mxu0 0
        %526 = vmatpush1.bf16.msra.mxu0 0
        %527 = vmatprep.subr.bf16.mxu0 0
        %528 = vmatpush1.bf16.msra.mxu0 0
        %529 = vmatprep.subr.bf16.mxu0 0
        %530 = vmatpush1.bf16.msra.mxu0 0
        %531 = vmatprep.subr.bf16.mxu0 0
        %532 = vmatpush1.bf16.msra.mxu0 0
        %533 = vmatprep.subr.bf16.mxu0 0
        %534 = vmatpush1.bf16.msra.mxu0 0
        %535 = vmatprep.subr.bf16.mxu0 0
        %536 = vmatpush1.bf16.msra.mxu0 0
        %537 = vmatprep.subr.bf16.mxu0 0
        %538 = vmatpush1.bf16.msra.mxu0 0
        %539 = vmatprep.subr.bf16.mxu0 0
        %540 = vmatpush1.bf16.msra.mxu0 0
        %541 = vmatprep.subr.bf16.mxu0 0
        %542 = vmatpush1.bf16.msra.mxu0 0
        %543 = vmatprep.subr.bf16.mxu0 0
        %544 = vmatpush1.bf16.msra.mxu0 0
        %545 = vmatprep.subr.bf16.mxu0 0
        %546 = vmatpush1.bf16.msra.mxu0 0
        %547 = vmatprep.subr.bf16.mxu0 0
        %548 = vmatpush1.bf16.msra.mxu0 0
        %549 = vmatprep.mubr.bf16.mxu0 0
        %550 = vmatmul.mubr.bf16.gmra.mrb[0].mxu0 %v505
        %v551 = vpop.f32.mrb[0].mxu0
        %v552 = vadd.f32 %v451, %v551
        %v553 = vpop.f32.mrb[0].mxu0
        %v554 = vadd.f32 %v451, %v553
        %v555 = vpop.f32.mrb[0].mxu0
        %v556 = vadd.f32 %v456, %v555
        %v557 = vpop.f32.mrb[0].mxu0
        %v558 = vadd.f32 %v456, %v557
        %559 = vdwg.mxu0
        %560 = vmatprep.subr.bf16.mxu0 0
        %561 = vmatpush1.bf16.msra.mxu0 %v490
        %562 = vmatprep.subr.bf16.mxu0 0
        %563 = vmatpush1.bf16.msra.mxu0 %v493
        %564 = vmatprep.subr.bf16.mxu0 0
        %565 = vmatpush1.bf16.msra.mxu0 %v515
        %566 = vmatprep.subr.bf16.mxu0 0
        %567 = vmatpush1.bf16.msra.mxu0 0
        %568 = vmatprep.subr.bf16.mxu0 0
        %569 = vmatpush1.bf16.msra.mxu0 0
        %570 = vmatprep.subr.bf16.mxu0 0
        %571 = vmatpush1.bf16.msra.mxu0 0
        %572 = vmatprep.subr.bf16.mxu0 0
        %573 = vmatpush1.bf16.msra.mxu0 0
        %574 = vmatprep.subr.bf16.mxu0 0
        %575 = vmatpush1.bf16.msra.mxu0 0
        %576 = vmatprep.subr.bf16.mxu0 0
        %577 = vmatpush1.bf16.msra.mxu0 0
        %578 = vmatprep.subr.bf16.mxu0 0
        %579 = vmatpush1.bf16.msra.mxu0 0
        %580 = vmatprep.subr.bf16.mxu0 0
        %581 = vmatpush1.bf16.msra.mxu0 0
        %582 = vmatprep.subr.bf16.mxu0 0
        %583 = vmatpush1.bf16.msra.mxu0 0
        %584 = vmatprep.subr.bf16.mxu0 0
        %585 = vmatpush1.bf16.msra.mxu0 0
        %586 = vmatprep.subr.bf16.mxu0 0
        %587 = vmatpush1.bf16.msra.mxu0 0
        %588 = vmatprep.subr.bf16.mxu0 0
        %589 = vmatpush1.bf16.msra.mxu0 0
        %590 = vmatprep.subr.bf16.mxu0 0
        %591 = vmatpush1.bf16.msra.mxu0 0
        %592 = vmatprep.mubr.bf16.mxu0 0
        %593 = vmatmul.mubr.bf16.gmra.mrb[0].mxu0 %v505
        %v594 = vpop.f32.mrb[0].mxu0
        %v595 = vadd.f32 %v451, %v594
        %v596 = vpop.f32.mrb[0].mxu0
        %v597 = vpop.f32.mrb[0].mxu0
        %v598 = vadd.f32 %v456, %v597
        %v599 = vpop.f32.mrb[0].mxu0
        %600 = vdwg.mxu0
        %v601 = vmax.f32 %v552, %v556
        %v602 = vmax.f32 %v554, %v558
        %v603 = vmax.f32 %v595, %v598
        %604 = vst [vmem:[%s163] sm:$0xff] %v601
        %605 = vst [vmem:[%s163 + $0x8] sm:$0xff] %v602
        %vm606 = vcmask 261120
        %607 = vst.msk [vmem:[%s163 + $0x10] sm:$0xff] %vm606, %v603
        %s608 = sand.u32 %s93, 1
        %s609 = scalar_lea.sflag [#allocation4], %s608
        %s610 = sand.u32 %s93, 1
        %s611 = smul.addr %s610, 24
        %s612 = scalar_lea.vmem [#allocation3], %s611
        // Predicated region
        $region33: #{tpu_custom_call.1} parent=31 // pred_check
          %p613 = pneg %p103
        $region34: #{tpu_custom_call.1} parent=31 // pred_check_branch
          %615 = sbr.rel (%p613) target = $region36
        $region35: #{tpu_custom_call.1} parent=31 // pred_region
          %s617 = ssub.s32 384, 384
          %618 = vsyncadd %s609, %s617
          %s619 = smul.addr %s17, 3
          %s620 = smul.addr %s619, 128
          %s621 = scalar_lea.hbm %s3, %s620
          %s623 = sshll.u32 %s612, 4
          %s624 = int_to_ptr.vmem [resolvable:$true] %s623
          %626 = dma.vmem_to_hbm [thread:$0]  %s624, 384, %s621, %s609
        $region36: #{tpu_custom_call.1} parent=31 // pred_fallthru
          _
      $region32: #{tpu_custom_call.1} parent=5 // pred_fallthru
        _
      %p627 = scmp.le.s32.totalorder 2, %s12
      // Predicated region
      $region37: #{tpu_custom_call.1} parent=5 // pred_check
        %p628 = pneg %p627
      $region38: #{tpu_custom_call.1} parent=5 // pred_check_branch
        %630 = sbr.rel (%p628) target = $region40
      $region39: #{tpu_custom_call.1} parent=5 // pred_region
        %s631 = ssub.s32 %s12, 2
        // Predicated region
        $region41: #{tpu_custom_call.1} parent=39 // pred_check
          %p632 = pneg %p109
        $region42: #{tpu_custom_call.1} parent=39 // pred_check_branch
          %634 = sbr.rel (%p632) target = $region44
        $region43: #{tpu_custom_call.1} parent=39 // pred_region
          %s635 = sand.u32 %s94, 1
          %s636 = scalar_lea.sflag [#allocation4], %s635
          %s637 = sand.u32 %s94, 1
          %s638 = smul.addr %s637, 24
          %s639 = scalar_lea.vmem [#allocation3], %s638
          %640 = dma.done %s636, 384
        $region44: #{tpu_custom_call.1} parent=39 // pred_fallthru
          _
      $region40: #{tpu_custom_call.1} parent=5 // pred_fallthru
        _
    $region6: #{tpu_custom_call.1} parent=1 // loop_footer
      %s16 = sadd.s32 1, %s12
    $region7: #{tpu_custom_call.1} parent=1 // loop_footer_branch
      %11 = sbr.rel target = $region3
    $region8: #{tpu_custom_call.1} parent=1 // loop_exit
      _
    %641 = vsyncpa [#allocation4], 1
    %s642 = scalar_lea.sflag [#allocation4], 1
    %643 = vsyncpa %s642, 1

</llo_original>
